<compile_context>
chip_gen: v6e
topology: v6e:2x2x1
jax: 0.10.0
libtpu: 0.0.40
codegen_flags: <defaults>
</compile_context>

<pallas_src>
import jax
import jax.numpy as jnp
from jax.experimental import pallas as pl
from jax.experimental.pallas import tpu as pltpu


def studnet_kernel(x_ref, wc_ref, bc_ref, fs_ref, logit_ref):
    # Cast f32 -> bf16 in-kernel (cheap; avoids an extra HBM copy of x).
    x = x_ref[...].astype(jnp.bfloat16)                       # (tb, f_dim)

    # One concatenated-N MXU pass:  [fs | logit] = x @ [W1 | W1@W2] + [b1 | b1@W2+b2]
    acc = jnp.dot(x, wc_ref[...], preferred_element_type=jnp.float32) + bc_ref[...]

    fpad = fs_ref.shape[-1]                                    # 128-lane boundary
    fs_ref[...] = acc[:, :fpad].astype(fs_ref.dtype)
    logit_ref[...] = acc[:, fpad:].astype(logit_ref.dtype)

    # self.dropout is declared in __init__ but never used in forward -> omitted.


def _round_up(n, m):
    return ((n + m - 1) // m) * m


def make_studnet_forward(w1, b1, w2, b2, *, out_dtype=jnp.float32, tb_cap=512):
    """Build a jitted forward(x) for StudNet.

    w1: (f_dim, feature_dim), b1: (1, feature_dim)   -- fit_dim_Net (stored (in, out))
    w2: (feature_dim, n_classes), b2: (1, n_classes) -- cl_Net
    All weight fusion / padding / bf16 casting happens ONCE here (hoisted out of
    the per-call hot path) and is closed over by the returned function.
    """
    f_dim, feature_dim = w1.shape
    n_classes = w2.shape[1]

    # ---- one-time fused / padded / cast weights (f32 accumulation) ----
    w12 = jnp.dot(w1, w2, preferred_element_type=jnp.float32)        # (f_dim, n_classes)
    b12 = jnp.dot(b1, w2, preferred_element_type=jnp.float32) + b2   # (1, n_classes)

    fpad = _round_up(feature_dim, 128)   # lane-dense fs output
    npad = _round_up(n_classes, 128)     # lane-dense logit output

    w1p = jnp.pad(w1, ((0, 0), (0, fpad - feature_dim)))
    b1p = jnp.pad(b1, ((0, 0), (0, fpad - feature_dim)))
    w12p = jnp.pad(w12, ((0, 0), (0, npad - n_classes)))
    b12p = jnp.pad(b12, ((0, 0), (0, npad - n_classes)))

    # Concatenate RHS operands -> single matmul in the kernel.
    wc = jnp.concatenate([w1p, w12p], axis=1).astype(jnp.bfloat16)   # (f_dim, fpad+npad)
    bc = jnp.concatenate([b1p, b12p], axis=1).astype(jnp.float32)    # (1, fpad+npad)
    wc = jax.device_put(wc)
    bc = jax.device_put(bc)

    @jax.jit
    def forward(x):
        B = x.shape[0]

        # ---- batch tiling: 16-row alignment (bf16 sublane packing) ----
        b_pad = _round_up(B, 16)
        tb = min(b_pad, tb_cap)
        # Keep >=2 grid tiles when batch allows it so the "parallel" axis can
        # shard across v7x's two TensorCores.
        if b_pad > 16 and b_pad // tb < 2:
            tb = max(16, _round_up(pl.cdiv(b_pad, 2), 16))
        b_pad = _round_up(b_pad, tb)
        grid = (b_pad // tb,)

        xb = x if b_pad == B else jnp.pad(x, ((0, b_pad - B), (0, 0)))
        xb = xb.astype(jnp.float32)   # stays f32; cast to bf16 inside the kernel

        # Advisory cost estimate so XLA overlaps this small, latency-bound call.
        flops = 2 * b_pad * f_dim * (fpad + npad)
        bytes_accessed = (
            xb.size * 4 + wc.size * 2 + bc.size * 4
            + b_pad * fpad * jnp.dtype(out_dtype).itemsize
            + b_pad * npad * jnp.dtype(out_dtype).itemsize
        )
        cost = pl.CostEstimate(flops=flops, transcendentals=0,
                               bytes_accessed=bytes_accessed)

        fs_p, logit_p = pl.pallas_call(
            studnet_kernel,
            out_shape=(
                jax.ShapeDtypeStruct((b_pad, fpad), out_dtype),
                jax.ShapeDtypeStruct((b_pad, npad), out_dtype),
            ),
            grid=grid,
            in_specs=[
                pl.BlockSpec((tb, f_dim), lambda i: (i, 0)),          # x tile (f32)
                pl.BlockSpec((f_dim, fpad + npad), lambda i: (0, 0)),  # [W1|W12] resident
                pl.BlockSpec((1, fpad + npad), lambda i: (0, 0)),      # [b1|b12] resident
            ],
            out_specs=(
                pl.BlockSpec((tb, fpad), lambda i: (i, 0)),
                pl.BlockSpec((tb, npad), lambda i: (i, 0)),
            ),
            compiler_params=pltpu.CompilerParams(
                dimension_semantics=("parallel",),
            ),
            cost_estimate=cost,
        )(xb, wc, bc)

        # slice padded outputs back to logical shapes
        return fs_p[:B, :feature_dim], logit_p[:B, :n_classes]

    return forward


def init_params(key, f_dim, feature_dim, n_classes=1000):
    """Deterministic synthetic init (PyTorch-Linear-like uniform bounds)."""
    k1, k2, k3, k4 = jax.random.split(key, 4)
    bound1 = 1.0 / jnp.sqrt(f_dim)
    bound2 = 1.0 / jnp.sqrt(feature_dim)
    # stored transposed: (in, out), so y = x @ W + b == PyTorch x @ weight.T + bias
    w1 = jax.random.uniform(k1, (f_dim, feature_dim), jnp.float32, -bound1, bound1)
    b1 = jax.random.uniform(k2, (1, feature_dim), jnp.float32, -bound1, bound1)
    w2 = jax.random.uniform(k3, (feature_dim, n_classes), jnp.float32, -bound2, bound2)
    b2 = jax.random.uniform(k4, (1, n_classes), jnp.float32, -bound2, bound2)
    return w1, b1, w2, b2


if __name__ == "__main__":
    key = jax.random.PRNGKey(0)
    kx, kp = jax.random.split(key)

    B, f_dim, feature_dim, n_classes = 8, 32, 64, 1000

    x = jax.random.normal(kx, (B, f_dim), jnp.float32)
    w1, b1, w2, b2 = init_params(kp, f_dim, feature_dim, n_classes)

    # Build once (weight fusion / padding / casts are hoisted here), call many times.
    studnet_forward = make_studnet_forward(w1, b1, w2, b2)

    fs, logit = studnet_forward(x)
    jax.block_until_ready((fs, logit))

    # sanity check against plain-JAX f32 reference (bf16 operands + layer
    # fusion loosen the tolerance vs. exact f32)
    fs_ref = x @ w1 + b1
    logit_ref = fs_ref @ w2 + b2
    assert fs.shape == (B, feature_dim) and logit.shape == (B, n_classes)
    assert jnp.allclose(fs, fs_ref, atol=3e-2, rtol=3e-2)
    assert jnp.allclose(logit, logit_ref, atol=3e-2, rtol=3e-2)

    print("KERNEL_OK")
</pallas_src>

<mosaic_0001>
module attributes {stable_mosaic.version = 11 : i64} {
  func.func @studnet_kernel(%arg0: i32, %arg1: memref<16x32xf32, #tpu.memory_space<vmem>>, %arg2: memref<32x1152xbf16, #tpu.memory_space<vmem>>, %arg3: memref<1x1152xf32, #tpu.memory_space<vmem>>, %arg4: memref<16x128xf32, #tpu.memory_space<vmem>>, %arg5: memref<16x1024xf32, #tpu.memory_space<vmem>>) attributes {dimension_semantics = [#tpu.dimension_semantics<parallel>], iteration_bounds = array<i64: 1>, scalar_prefetch = 0 : i64, scratch_operands = 0 : i64, tpu.core_type = #tpu.core_type<tc>, window_params = [{transform_indices = @transform_0, window_bounds = array<i64: 16, 32>}, {pipeline_mode = #tpu.pipeline_mode<synchronous>, transform_indices = @transform_1, window_bounds = array<i64: 32, 1152>}, {pipeline_mode = #tpu.pipeline_mode<synchronous>, transform_indices = @transform_2, window_bounds = array<i64: 1, 1152>}, {transform_indices = @transform_3, window_bounds = array<i64: 16, 128>}, {transform_indices = @transform_4, window_bounds = array<i64: 16, 1024>}]} {
    %c0 = arith.constant 0 : index
    %c0_0 = arith.constant 0 : index
    %0 = vector.load %arg1[%c0, %c0_0] : memref<16x32xf32, #tpu.memory_space<vmem>>, vector<16x32xf32>
    %1 = arith.truncf %0 : vector<16x32xf32> to vector<16x32xbf16>
    %c0_1 = arith.constant 0 : index
    %c0_2 = arith.constant 0 : index
    %2 = vector.load %arg2[%c0_1, %c0_2] : memref<32x1152xbf16, #tpu.memory_space<vmem>>, vector<32x1152xbf16>
    %cst = arith.constant dense<0.000000e+00> : vector<16x1152xf32>
    %3 = tpu.matmul %1, %2, %cst {dimension_numbers = #tpu.dot_dimension_numbers<[1], [0], [0], [1], [0, 0, 1, 1], [], []>} : vector<16x32xbf16>, vector<32x1152xbf16>, vector<16x1152xf32> -> vector<16x1152xf32>
    %c0_3 = arith.constant 0 : index
    %c0_4 = arith.constant 0 : index
    %4 = vector.load %arg3[%c0_3, %c0_4] : memref<1x1152xf32, #tpu.memory_space<vmem>>, vector<1x1152xf32>
    %5 = vector.broadcast %4 : vector<1x1152xf32> to vector<16x1152xf32>
    %6 = arith.addf %3, %5 : vector<16x1152xf32>
    %7 = vector.extract_strided_slice %6 {offsets = [0, 0], sizes = [16, 128], strides = [1, 1]} : vector<16x1152xf32> to vector<16x128xf32>
    %c0_5 = arith.constant 0 : index
    %c0_6 = arith.constant 0 : index
    %8 = vector.load %arg4[%c0_5, %c0_6] : memref<16x128xf32, #tpu.memory_space<vmem>>, vector<16x128xf32>
    tpu.vector_store %arg4[%c0_5, %c0_6], %7 {strides = array<i32>} : memref<16x128xf32, #tpu.memory_space<vmem>>, vector<16x128xf32>,
    %9 = vector.extract_strided_slice %6 {offsets = [0, 128], sizes = [16, 1024], strides = [1, 1]} : vector<16x1152xf32> to vector<16x1024xf32>
    %c0_7 = arith.constant 0 : index
    %c0_8 = arith.constant 0 : index
    %10 = vector.load %arg5[%c0_7, %c0_8] : memref<16x1024xf32, #tpu.memory_space<vmem>>, vector<16x1024xf32>
    tpu.vector_store %arg5[%c0_7, %c0_8], %9 {strides = array<i32>} : memref<16x1024xf32, #tpu.memory_space<vmem>>, vector<16x1024xf32>,
    return
  }
  func.func @transform_0(%arg0: i32) -> (i32, i32) {
    %c0_i32 = arith.constant 0 : i32
    %c0_i32_0 = arith.constant 0 : i32
    return %arg0, %c0_i32 : i32, i32
  }
  func.func @transform_1(%arg0: i32) -> (i32, i32) {
    %c0_i32 = arith.constant 0 : i32
    %c0_i32_0 = arith.constant 0 : i32
    %c0_i32_1 = arith.constant 0 : i32
    return %c0_i32, %c0_i32_0 : i32, i32
  }
  func.func @transform_2(%arg0: i32) -> (i32, i32) {
    %c0_i32 = arith.constant 0 : i32
    %c0_i32_0 = arith.constant 0 : i32
    %c0_i32_1 = arith.constant 0 : i32
    return %c0_i32, %c0_i32_0 : i32, i32
  }
  func.func @transform_3(%arg0: i32) -> (i32, i32) {
    %c0_i32 = arith.constant 0 : i32
    %c0_i32_0 = arith.constant 0 : i32
    return %arg0, %c0_i32 : i32, i32
  }
  func.func @transform_4(%arg0: i32) -> (i32, i32) {
    %c0_i32 = arith.constant 0 : i32
    %c0_i32_0 = arith.constant 0 : i32
    return %arg0, %c0_i32 : i32, i32
  }
}

</mosaic_0001>

<llo_original>
// kernel: forward.1
$region0: #{forward.1}
  #allocation0 [shape = 'u32[]', space=smem, size = 0x4, offset = 0x4, fixed_abs, tag = 'smem constant byte address 0x4 - core index']
  #allocation1 [shape = 'u32[144,128]{1,0:T(1,128)}', space=vmem, size = 0x12000, scoped, tag = 'internal scratch']
  %s0 = inlined_call_operand.vmem [shape: f32[16,32], index: 0, kind: input, shape index: {}]
  %s1 = inlined_call_operand.hbm [shape: bf16[32,1152], index: 1, kind: input, shape index: {}]
  %s2 = inlined_call_operand.vmem [shape: f32[1,1152], index: 2, kind: input, shape index: {}]
  %s3 = inlined_call_operand.vmem [shape: f32[16,128], index: 3, kind: output, shape index: {0}]
  %s4 = inlined_call_operand.vmem [shape: f32[16,1024], index: 4, kind: output, shape index: {1}]
  %5 = xla_tuple %s3, %s4
  %s6 = sld [smem:[#allocation0]]
  $region34: #{forward.1} parent=0
    _
  %s8 = ssub.s32 1, %s6
  %s9 = scalar_select 0, %s8, %s6
  $region1: #{forward.1} parent=0
    #allocation2 [shape = 'u8[73728]{0}', space=vmem, size = 0x12000, scoped, tag = 'input window, operand 1, single buffered']
    #allocation3 [shape = 's32[1]{0}', space=sflag, size = 0x4, scoped, tag = 'scoped memory for forward.1']
    %10 = vsyncpa [#allocation3], 0
    // Predicated region
    $region2: #{forward.1} parent=1 // pred_check
      _
    $region3: #{forward.1} parent=1 // pred_check_branch
      %12 = sbr.rel (0) target = $region5
    $region4: #{forward.1} parent=1 // pred_region
      _
    $region5: #{forward.1} parent=1 // pred_fallthru
      _
    // Predicated region
    $region6: #{forward.1} parent=1 // pred_check
      _
    $region7: #{forward.1} parent=1 // pred_check_branch
      %14 = sbr.rel (0) target = $region9
    $region8: #{forward.1} parent=1 // pred_region
      %s16 = ssub.s32 2304, 2304
      %17 = vsyncadd [#allocation3], %s16
      %s18 = sshll.u32 [#allocation2], 4
      %s19 = int_to_ptr.vmem [resolvable:$true] %s18
      %24 = dma.hbm_to_vmem [thread:$0]  %s1, 2304, %s19, [#allocation3], 576, 576, 36
    $region9: #{forward.1} parent=1 // pred_fallthru
      _
    // Predicated region
    $region10: #{forward.1} parent=1 // pred_check
      _
    $region11: #{forward.1} parent=1 // pred_check_branch
      %26 = sbr.rel (0) target = $region13
    $region12: #{forward.1} parent=1 // pred_region
      _
    $region13: #{forward.1} parent=1 // pred_fallthru
      _
    // Predicated region
    $region14: #{forward.1} parent=1 // pred_check
      _
    $region15: #{forward.1} parent=1 // pred_check_branch
      %28 = sbr.rel (0) target = $region17
    $region16: #{forward.1} parent=1 // pred_region
      %29 = dma.done [#allocation3], 2304
    $region17: #{forward.1} parent=1 // pred_fallthru
      _
    %v31 = vld [vmem:[%s0] sm:$0xff]
    %v32 = vld [vmem:[%s0 + $0x8] sm:$0xff]
    %v33 = vpack.c.bf16 %v32, %v31
    %v34 = vld [vmem:[#allocation2] sm:$0xff]
    %v35 = vld [vmem:[#allocation2 + $0x8] sm:$0xff]
    %v36 = vld [vmem:[#allocation2 + $0x10] sm:$0xff]
    %v37 = vld [vmem:[#allocation2 + $0x18] sm:$0xff]
    %v38 = vld [vmem:[#allocation2 + $0x20] sm:$0xf]
    %v39 = vld [vmem:[#allocation2 + $0x24] sm:$0xff]
    %v40 = vld [vmem:[#allocation2 + $0x2c] sm:$0xff]
    %v41 = vld [vmem:[#allocation2 + $0x34] sm:$0xff]
    %v42 = vld [vmem:[#allocation2 + $0x3c] sm:$0xff]
    %v43 = vld [vmem:[#allocation2 + $0x44] sm:$0xf]
    %v44 = vld [vmem:[#allocation2 + $0x48] sm:$0xff]
    %v45 = vld [vmem:[#allocation2 + $0x50] sm:$0xff]
    %v46 = vld [vmem:[#allocation2 + $0x58] sm:$0xff]
    %v47 = vld [vmem:[#allocation2 + $0x60] sm:$0xff]
    %v48 = vld [vmem:[#allocation2 + $0x68] sm:$0xf]
    %v49 = vld [vmem:[#allocation2 + $0x6c] sm:$0xff]
    %v50 = vld [vmem:[#allocation2 + $0x74] sm:$0xff]
    %v51 = vld [vmem:[#allocation2 + $0x7c] sm:$0xff]
    %v52 = vld [vmem:[#allocation2 + $0x84] sm:$0xff]
    %v53 = vld [vmem:[#allocation2 + $0x8c] sm:$0xf]
    %v54 = vld [vmem:[%s2] sm:$0xff]
    %v55 = vld [vmem:[%s2 + $0x8] sm:$0x1]
    %v58 = vlaneseq
    %v59 = vshrl.u32 %v58, 7
    %v60 = vsub.s32 0, %v59
    %v61 = vrot.slane %v54, %v60
    %v62 = vlaneseq
    %v63 = vshrl.u32 %v62, 7
    %v64 = vsub.s32 1, %v63
    %v65 = vrot.slane %v54, %v64
    %v66 = vlaneseq
    %v67 = vshrl.u32 %v66, 7
    %v68 = vsub.s32 2, %v67
    %v69 = vrot.slane %v54, %v68
    %v70 = vlaneseq
    %v71 = vshrl.u32 %v70, 7
    %v72 = vsub.s32 3, %v71
    %v73 = vrot.slane %v54, %v72
    %v74 = vlaneseq
    %v75 = vshrl.u32 %v74, 7
    %v76 = vsub.s32 4, %v75
    %v77 = vrot.slane %v54, %v76
    %v78 = vlaneseq
    %v79 = vshrl.u32 %v78, 7
    %v80 = vsub.s32 5, %v79
    %v81 = vrot.slane %v54, %v80
    %v82 = vlaneseq
    %v83 = vshrl.u32 %v82, 7
    %v84 = vsub.s32 6, %v83
    %v85 = vrot.slane %v54, %v84
    %v86 = vlaneseq
    %v87 = vshrl.u32 %v86, 7
    %v88 = vsub.s32 7, %v87
    %v89 = vrot.slane %v54, %v88
    %v90 = vlaneseq
    %v91 = vshrl.u32 %v90, 7
    %v92 = vsub.s32 0, %v91
    %v93 = vrot.slane %v55, %v92
    %v123 = vunpack.c.l.b16 %v34
    %v124 = vunpack.c.h.b16 %v34
    %v125 = vunpack.c.l.b16 %v35
    %v126 = vunpack.c.h.b16 %v35
    %v127 = vunpack.c.l.b16 %v36
    %v128 = vunpack.c.h.b16 %v36
    %v129 = vunpack.c.l.b16 %v37
    %v130 = vunpack.c.h.b16 %v37
    %v131 = vunpack.c.l.b16 %v38
    %v132 = vunpack.c.l.b16 %v39
    %v133 = vunpack.c.h.b16 %v39
    %v134 = vunpack.c.l.b16 %v40
    %v135 = vunpack.c.h.b16 %v40
    %v136 = vunpack.c.l.b16 %v41
    %v137 = vunpack.c.h.b16 %v41
    %v138 = vunpack.c.l.b16 %v42
    %v139 = vunpack.c.h.b16 %v42
    %v140 = vunpack.c.l.b16 %v43
    %v141 = vunpack.c.l.b16 %v44
    %v142 = vunpack.c.h.b16 %v44
    %v143 = vunpack.c.l.b16 %v45
    %v144 = vunpack.c.h.b16 %v45
    %v145 = vunpack.c.l.b16 %v46
    %v146 = vunpack.c.h.b16 %v46
    %v147 = vunpack.c.l.b16 %v47
    %v148 = vunpack.c.h.b16 %v47
    %v149 = vunpack.c.l.b16 %v48
    %v150 = vunpack.c.l.b16 %v49
    %v151 = vunpack.c.h.b16 %v49
    %v152 = vunpack.c.l.b16 %v50
    %v153 = vunpack.c.h.b16 %v50
    %v154 = vunpack.c.l.b16 %v51
    %v155 = vunpack.c.h.b16 %v51
    %v156 = vunpack.c.l.b16 %v52
    %v157 = vunpack.c.h.b16 %v52
    %v158 = vunpack.c.l.b16 %v53
    %v159 = vpack.c.b16 %v132, %v123
    %v160 = vpack.c.b16 %v133, %v124
    %v161 = vpack.c.b16 %v134, %v125
    %v162 = vpack.c.b16 %v135, %v126
    %v163 = vpack.c.b16 %v136, %v127
    %v164 = vpack.c.b16 %v137, %v128
    %v165 = vpack.c.b16 %v138, %v129
    %v166 = vpack.c.b16 %v139, %v130
    %v167 = vpack.c.b16 %v140, %v131
    %v168 = vpack.c.b16 %v150, %v141
    %v169 = vpack.c.b16 %v151, %v142
    %v170 = vpack.c.b16 %v152, %v143
    %v171 = vpack.c.b16 %v153, %v144
    %v172 = vpack.c.b16 %v154, %v145
    %v173 = vpack.c.b16 %v155, %v146
    %v174 = vpack.c.b16 %v156, %v147
    %v175 = vpack.c.b16 %v157, %v148
    %v176 = vpack.c.b16 %v158, %v149
    %vm195 = vcmask 261120
    %v197 = vsel %vm195, %v33, 0
    %199 = vmatprep.subr.bf16.mxu0 0
    %200 = vmatpush1.bf16.msra.mxu0 0
    %201 = vmatprep.subr.bf16.mxu0 0
    %202 = vmatpush1.bf16.msra.mxu0 0
    %203 = vmatprep.subr.bf16.mxu0 0
    %204 = vmatpush1.bf16.msra.mxu0 0
    %205 = vmatprep.subr.bf16.mxu0 0
    %206 = vmatpush1.bf16.msra.mxu0 0
    %207 = vmatprep.subr.bf16.mxu0 0
    %208 = vmatpush1.bf16.msra.mxu0 0
    %209 = vmatprep.subr.bf16.mxu0 0
    %210 = vmatpush1.bf16.msra.mxu0 0
    %211 = vmatprep.subr.bf16.mxu0 %v169
    %212 = vmatpush1.bf16.msra.mxu0 %v168
    %213 = vmatprep.subr.bf16.mxu0 %v160
    %214 = vmatpush1.bf16.msra.mxu0 %v159
    %215 = vmatprep.subr.bf16.mxu0 0
    %216 = vmatpush2.bf16.msra.mxu0 0
    %217 = vmatprep.subr.bf16.mxu0 0
    %218 = vmatpush2.bf16.msra.mxu0 0
    %219 = vmatprep.subr.bf16.mxu0 0
    %220 = vmatpush2.bf16.msra.mxu0 0
    %221 = vmatprep.subr.bf16.mxu0 0
    %222 = vmatpush2.bf16.msra.mxu0 0
    %223 = vmatprep.subr.bf16.mxu0 0
    %224 = vmatpush2.bf16.msra.mxu0 0
    %225 = vmatprep.subr.bf16.mxu0 0
    %226 = vmatpush2.bf16.msra.mxu0 0
    %227 = vmatprep.subr.bf16.mxu0 0
    %228 = vmatpush2.bf16.msra.mxu0 0
    %229 = vmatprep.subr.bf16.mxu0 0
    %230 = vmatpush2.bf16.msra.mxu0 0
    %231 = vmatprep.mubr.bf16.mxu0 0
    %232 = vmatmul.mubr.bf16.gmra.mxu0 %v197
    %v233 = vpop.f32.mrf.mxu0
    %v234 = vadd.f32 %v61, %v233
    %v235 = vpop.f32.mrf.mxu0
    %v236 = vadd.f32 %v65, %v235
    %v237 = vpop.f32.mrf.mxu0
    %v238 = vadd.f32 %v61, %v237
    %v239 = vpop.f32.mrf.mxu0
    %v240 = vadd.f32 %v65, %v239
    %241 = vdwg.mxu0
    %242 = vmatprep.subr.bf16.mxu0 0
    %243 = vmatpush1.bf16.msra.mxu0 0
    %244 = vmatprep.subr.bf16.mxu0 0
    %245 = vmatpush1.bf16.msra.mxu0 0
    %246 = vmatprep.subr.bf16.mxu0 0
    %247 = vmatpush1.bf16.msra.mxu0 0
    %248 = vmatprep.subr.bf16.mxu0 0
    %249 = vmatpush1.bf16.msra.mxu0 0
    %250 = vmatprep.subr.bf16.mxu0 0
    %251 = vmatpush1.bf16.msra.mxu0 0
    %252 = vmatprep.subr.bf16.mxu0 0
    %253 = vmatpush1.bf16.msra.mxu0 0
    %254 = vmatprep.subr.bf16.mxu0 %v171
    %255 = vmatpush1.bf16.msra.mxu0 %v170
    %256 = vmatprep.subr.bf16.mxu0 %v162
    %257 = vmatpush1.bf16.msra.mxu0 %v161
    %258 = vmatprep.subr.bf16.mxu0 0
    %259 = vmatpush2.bf16.msra.mxu0 0
    %260 = vmatprep.subr.bf16.mxu0 0
    %261 = vmatpush2.bf16.msra.mxu0 0
    %262 = vmatprep.subr.bf16.mxu0 0
    %263 = vmatpush2.bf16.msra.mxu0 0
    %264 = vmatprep.subr.bf16.mxu0 0
    %265 = vmatpush2.bf16.msra.mxu0 0
    %266 = vmatprep.subr.bf16.mxu0 0
    %267 = vmatpush2.bf16.msra.mxu0 0
    %268 = vmatprep.subr.bf16.mxu0 0
    %269 = vmatpush2.bf16.msra.mxu0 0
    %270 = vmatprep.subr.bf16.mxu0 0
    %271 = vmatpush2.bf16.msra.mxu0 0
    %272 = vmatprep.subr.bf16.mxu0 0
    %273 = vmatpush2.bf16.msra.mxu0 0
    %274 = vmatprep.mubr.bf16.mxu0 0
    %275 = vmatmul.mubr.bf16.gmra.mxu0 %v197
    %v276 = vpop.f32.mrf.mxu0
    %v277 = vadd.f32 %v69, %v276
    %v278 = vpop.f32.mrf.mxu0
    %v279 = vadd.f32 %v73, %v278
    %v280 = vpop.f32.mrf.mxu0
    %v281 = vadd.f32 %v69, %v280
    %v282 = vpop.f32.mrf.mxu0
    %v283 = vadd.f32 %v73, %v282
    %284 = vdwg.mxu0
    %285 = vmatprep.subr.bf16.mxu0 0
    %286 = vmatpush1.bf16.msra.mxu0 0
    %287 = vmatprep.subr.bf16.mxu0 0
    %288 = vmatpush1.bf16.msra.mxu0 0
    %289 = vmatprep.subr.bf16.mxu0 0
    %290 = vmatpush1.bf16.msra.mxu0 0
    %291 = vmatprep.subr.bf16.mxu0 0
    %292 = vmatpush1.bf16.msra.mxu0 0
    %293 = vmatprep.subr.bf16.mxu0 0
    %294 = vmatpush1.bf16.msra.mxu0 0
    %295 = vmatprep.subr.bf16.mxu0 0
    %296 = vmatpush1.bf16.msra.mxu0 0
    %297 = vmatprep.subr.bf16.mxu0 %v173
    %298 = vmatpush1.bf16.msra.mxu0 %v172
    %299 = vmatprep.subr.bf16.mxu0 %v164
    %300 = vmatpush1.bf16.msra.mxu0 %v163
    %301 = vmatprep.subr.bf16.mxu0 0
    %302 = vmatpush2.bf16.msra.mxu0 0
    %303 = vmatprep.subr.bf16.mxu0 0
    %304 = vmatpush2.bf16.msra.mxu0 0
    %305 = vmatprep.subr.bf16.mxu0 0
    %306 = vmatpush2.bf16.msra.mxu0 0
    %307 = vmatprep.subr.bf16.mxu0 0
    %308 = vmatpush2.bf16.msra.mxu0 0
    %309 = vmatprep.subr.bf16.mxu0 0
    %310 = vmatpush2.bf16.msra.mxu0 0
    %311 = vmatprep.subr.bf16.mxu0 0
    %312 = vmatpush2.bf16.msra.mxu0 0
    %313 = vmatprep.subr.bf16.mxu0 0
    %314 = vmatpush2.bf16.msra.mxu0 0
    %315 = vmatprep.subr.bf16.mxu0 0
    %316 = vmatpush2.bf16.msra.mxu0 0
    %317 = vmatprep.mubr.bf16.mxu0 0
    %318 = vmatmul.mubr.bf16.gmra.mxu0 %v197
    %v319 = vpop.f32.mrf.mxu0
    %v320 = vadd.f32 %v77, %v319
    %v321 = vpop.f32.mrf.mxu0
    %v322 = vadd.f32 %v81, %v321
    %v323 = vpop.f32.mrf.mxu0
    %v324 = vadd.f32 %v77, %v323
    %v325 = vpop.f32.mrf.mxu0
    %v326 = vadd.f32 %v81, %v325
    %327 = vdwg.mxu0
    %328 = vmatprep.subr.bf16.mxu0 0
    %329 = vmatpush1.bf16.msra.mxu0 0
    %330 = vmatprep.subr.bf16.mxu0 0
    %331 = vmatpush1.bf16.msra.mxu0 0
    %332 = vmatprep.subr.bf16.mxu0 0
    %333 = vmatpush1.bf16.msra.mxu0 0
    %334 = vmatprep.subr.bf16.mxu0 0
    %335 = vmatpush1.bf16.msra.mxu0 0
    %336 = vmatprep.subr.bf16.mxu0 0
    %337 = vmatpush1.bf16.msra.mxu0 0
    %338 = vmatprep.subr.bf16.mxu0 0
    %339 = vmatpush1.bf16.msra.mxu0 0
    %340 = vmatprep.subr.bf16.mxu0 %v175
    %341 = vmatpush1.bf16.msra.mxu0 %v174
    %342 = vmatprep.subr.bf16.mxu0 %v166
    %343 = vmatpush1.bf16.msra.mxu0 %v165
    %344 = vmatprep.subr.bf16.mxu0 0
    %345 = vmatpush2.bf16.msra.mxu0 0
    %346 = vmatprep.subr.bf16.mxu0 0
    %347 = vmatpush2.bf16.msra.mxu0 0
    %348 = vmatprep.subr.bf16.mxu0 0
    %349 = vmatpush2.bf16.msra.mxu0 0
    %350 = vmatprep.subr.bf16.mxu0 0
    %351 = vmatpush2.bf16.msra.mxu0 0
    %352 = vmatprep.subr.bf16.mxu0 0
    %353 = vmatpush2.bf16.msra.mxu0 0
    %354 = vmatprep.subr.bf16.mxu0 0
    %355 = vmatpush2.bf16.msra.mxu0 0
    %356 = vmatprep.subr.bf16.mxu0 0
    %357 = vmatpush2.bf16.msra.mxu0 0
    %358 = vmatprep.subr.bf16.mxu0 0
    %359 = vmatpush2.bf16.msra.mxu0 0
    %360 = vmatprep.mubr.bf16.mxu0 0
    %361 = vmatmul.mubr.bf16.gmra.mxu0 %v197
    %v362 = vpop.f32.mrf.mxu0
    %v363 = vadd.f32 %v85, %v362
    %v364 = vpop.f32.mrf.mxu0
    %v365 = vadd.f32 %v89, %v364
    %v366 = vpop.f32.mrf.mxu0
    %v367 = vadd.f32 %v85, %v366
    %v368 = vpop.f32.mrf.mxu0
    %v369 = vadd.f32 %v89, %v368
    %370 = vdwg.mxu0
    %371 = vmatprep.subr.bf16.mxu0 0
    %372 = vmatpush1.bf16.msra.mxu0 0
    %373 = vmatprep.subr.bf16.mxu0 0
    %374 = vmatpush1.bf16.msra.mxu0 0
    %375 = vmatprep.subr.bf16.mxu0 0
    %376 = vmatpush1.bf16.msra.mxu0 0
    %377 = vmatprep.subr.bf16.mxu0 0
    %378 = vmatpush1.bf16.msra.mxu0 0
    %379 = vmatprep.subr.bf16.mxu0 0
    %380 = vmatpush1.bf16.msra.mxu0 0
    %381 = vmatprep.subr.bf16.mxu0 0
    %382 = vmatpush1.bf16.msra.mxu0 0
    %383 = vmatprep.subr.bf16.mxu0 0
    %384 = vmatpush1.bf16.msra.mxu0 %v176
    %385 = vmatprep.subr.bf16.mxu0 0
    %386 = vmatpush1.bf16.msra.mxu0 %v167
    %387 = vmatprep.subr.bf16.mxu0 0
    %388 = vmatpush2.bf16.msra.mxu0 0
    %389 = vmatprep.subr.bf16.mxu0 0
    %390 = vmatpush2.bf16.msra.mxu0 0
    %391 = vmatprep.subr.bf16.mxu0 0
    %392 = vmatpush2.bf16.msra.mxu0 0
    %393 = vmatprep.subr.bf16.mxu0 0
    %394 = vmatpush2.bf16.msra.mxu0 0
    %395 = vmatprep.subr.bf16.mxu0 0
    %396 = vmatpush2.bf16.msra.mxu0 0
    %397 = vmatprep.subr.bf16.mxu0 0
    %398 = vmatpush2.bf16.msra.mxu0 0
    %399 = vmatprep.subr.bf16.mxu0 0
    %400 = vmatpush2.bf16.msra.mxu0 0
    %401 = vmatprep.subr.bf16.mxu0 0
    %402 = vmatpush2.bf16.msra.mxu0 0
    %403 = vmatprep.mubr.bf16.mxu0 0
    %404 = vmatmul.mubr.bf16.gmra.mxu0 %v197
    %v405 = vpop.f32.mrf.mxu0
    %v406 = vadd.f32 %v93, %v405
    %v407 = vpop.f32.mrf.mxu0
    %v408 = vpop.f32.mrf.mxu0
    %v409 = vadd.f32 %v93, %v408
    %v410 = vpop.f32.mrf.mxu0
    %411 = vdwg.mxu0
    %412 = vst [vmem:[%s3] sm:$0xff] %v234
    %413 = vst [vmem:[%s3 + $0x8] sm:$0xff] %v238
    %414 = vst [vmem:[%s4] sm:$0xff] %v236
    %415 = vst [vmem:[%s4 + $0x8] sm:$0xff] %v277
    %416 = vst [vmem:[%s4 + $0x10] sm:$0xff] %v279
    %417 = vst [vmem:[%s4 + $0x18] sm:$0xff] %v320
    %418 = vst [vmem:[%s4 + $0x20] sm:$0xff] %v322
    %419 = vst [vmem:[%s4 + $0x28] sm:$0xff] %v363
    %420 = vst [vmem:[%s4 + $0x30] sm:$0xff] %v365
    %421 = vst [vmem:[%s4 + $0x38] sm:$0xff] %v406
    %422 = vst [vmem:[%s4 + $0x40] sm:$0xff] %v240
    %423 = vst [vmem:[%s4 + $0x48] sm:$0xff] %v281
    %424 = vst [vmem:[%s4 + $0x50] sm:$0xff] %v283
    %425 = vst [vmem:[%s4 + $0x58] sm:$0xff] %v324
    %426 = vst [vmem:[%s4 + $0x60] sm:$0xff] %v326
    %427 = vst [vmem:[%s4 + $0x68] sm:$0xff] %v367
    %428 = vst [vmem:[%s4 + $0x70] sm:$0xff] %v369
    %429 = vst [vmem:[%s4 + $0x78] sm:$0xff] %v409
    // Predicated region
    $region18: #{forward.1} parent=1 // pred_check
      _
    $region19: #{forward.1} parent=1 // pred_check_branch
      %431 = sbr.rel (0) target = $region21
    $region20: #{forward.1} parent=1 // pred_region
      _
    $region21: #{forward.1} parent=1 // pred_fallthru
      _
    // Predicated region
    $region22: #{forward.1} parent=1 // pred_check
      _
    $region23: #{forward.1} parent=1 // pred_check_branch
      %433 = sbr.rel (0) target = $region25
    $region24: #{forward.1} parent=1 // pred_region
      _
    $region25: #{forward.1} parent=1 // pred_fallthru
      _
    // Predicated region
    $region26: #{forward.1} parent=1 // pred_check
      _
    $region27: #{forward.1} parent=1 // pred_check_branch
      %435 = sbr.rel (0) target = $region29
    $region28: #{forward.1} parent=1 // pred_region
      _
    $region29: #{forward.1} parent=1 // pred_fallthru
      _
    // Predicated region
    $region30: #{forward.1} parent=1 // pred_check
      _
    $region31: #{forward.1} parent=1 // pred_check_branch
      %437 = sbr.rel (0) target = $region33
    $region32: #{forward.1} parent=1 // pred_region
      _
    $region33: #{forward.1} parent=1 // pred_fallthru
      _
    %438 = vsyncpa [#allocation3], 1

</llo_original>
